<compile_context>
chip_gen: v6e
topology: v6e:2x2x1
jax: 0.10.0
libtpu: 0.0.40
codegen_flags: <defaults>
</compile_context>

<pallas_src>
import math

import jax
import jax.numpy as jnp
from jax import lax
from jax.experimental import pallas as pl
from jax.experimental.pallas import tpu as pltpu


def _round_up(v, m):
    return ((v + m - 1) // m) * m


def _num_tensorcores_per_chip():
    """v7x exposes 2 TensorCores per chip (a "parallel" grid axis is split
    across them); every earlier generation has a single TC per device."""
    try:
        kind = jax.devices()[0].device_kind.lower()
    except Exception:
        return 1
    return 2 if "7" in kind else 1


def _vmem_capacity_bytes():
    try:
        return int(pltpu.get_tpu_info().vmem_capacity_bytes)
    except Exception:
        return 64 << 20  # conservative fallback = v7x per-TC VMEM


def prepare_posdef_icnn_params(Ws, Us, negative_slope=0.05):
    """One-time parameter prep (transpose, softplus, negative_slope folding,
    wide concat of the hidden W's).  Call once, reuse for every forward call."""
    assert len(Ws) == len(Us) + 1 and len(Us) >= 1
    Ws = [jnp.asarray(w, jnp.float32) for w in Ws]
    Us = [jnp.asarray(u, jnp.float32) for u in Us]
    out_dim = int(Ws[-1].shape[0])
    hidden_sizes = tuple(int(w.shape[0]) for w in Ws[:-1])

    # Fused x-side operand: ONLY the hidden-layer W's (lane-aligned slices when
    # hidden widths are multiples of 128).  W_last is handled separately.
    w_cat = jnp.concatenate([w.T for w in Ws[:-1]], axis=1)            # (d_in, sum hidden)

    # negative_slope folded into the hidden softplus(U) operands.
    su_hidden = tuple(jax.nn.softplus(u).T * jnp.float32(negative_slope)
                      for u in Us[:-1])                                # (l_i, l_{i+1})

    if out_dim == 1:
        w_last = Ws[-1]                                                # (1, d_in) row
        su_last = jax.nn.softplus(Us[-1])                              # (1, l_k) row
    else:
        w_last = Ws[-1].T                                              # (d_in, out_dim)
        su_last = jax.nn.softplus(Us[-1]).T                            # (l_k, out_dim)

    return dict(w_cat=w_cat, w_last=w_last, su_hidden=su_hidden, su_last=su_last,
                hidden_sizes=hidden_sizes, out_dim=out_dim,
                negative_slope=float(negative_slope))


def _make_kernel(hidden_sizes, out_dim, negative_slope, eps):
    num_hidden = len(hidden_sizes)
    offs, o = [], 0
    for c in hidden_sizes:
        offs.append(o)
        o += c
    # Contract last dims of both operands: (m,k) x (n,k) -> (m,n)  (NT matmul).
    nt_dims = (((1,), (1,)), ((), ()))

    def kernel(x_ref, wcat_ref, wlast_ref, sulast_ref, *rest):
        su_refs = rest[:-1]       # hidden softplus(U)^T * negative_slope (VMEM-resident)
        out_ref = rest[-1]
        ns = jnp.float32(negative_slope)
        x = x_ref[...]                                                  # (tb, d_in)

        # One wide MXU pass for every hidden-layer x-contribution.
        xw = jnp.dot(x, wcat_ref[...], preferred_element_type=jnp.float32)

        # z = leaky_relu(x @ W0^T)
        z = xw[:, offs[0]:offs[0] + hidden_sizes[0]]
        z = jnp.where(z >= 0, z, ns * z)

        # hidden ICNN layers: z = leaky_relu(x @ W^T + z @ (softplus(U)^T * ns))
        for li in range(1, num_hidden):
            zx = xw[:, offs[li]:offs[li] + hidden_sizes[li]]
            z = zx + jnp.dot(z, su_refs[li - 1][...], preferred_element_type=jnp.float32)
            z = jnp.where(z >= 0, z, ns * z)

        if out_dim == 1:
            # Final layer + eps*||x||^2 computed directly in a (1, tb) lane-dense
            # row layout (M=1 NT dots), so the output store is a dense row.
            a_row = lax.dot_general(wlast_ref[...], x, nt_dims,
                                    preferred_element_type=jnp.float32)
            b_row = lax.dot_general(sulast_ref[...], z, nt_dims,
                                    preferred_element_type=jnp.float32)
            eps_row = jnp.full((1, x.shape[1]), eps, jnp.float32)
            c_row = lax.dot_general(eps_row, x * x, nt_dims,
                                    preferred_element_type=jnp.float32)
            out_ref[...] = jnp.maximum(a_row + b_row, 0.0) + c_row
        else:
            zf = (jnp.dot(x, wlast_ref[...], preferred_element_type=jnp.float32)
                  + jnp.dot(z, sulast_ref[...], preferred_element_type=jnp.float32))
            out_ref[...] = (jnp.maximum(zf, 0.0)
                            + jnp.float32(eps) * jnp.sum(x * x, axis=1, keepdims=True))

    return kernel


def posdef_icnn_forward(x, prepared, eps=0.1, tb=1024):
    """Batch-tiled Pallas forward.  `prepared` = prepare_posdef_icnn_params(...)."""
    w_cat = prepared["w_cat"]
    w_last = prepared["w_last"]
    su_hidden = prepared["su_hidden"]
    su_last = prepared["su_last"]
    hidden_sizes = prepared["hidden_sizes"]
    out_dim = prepared["out_dim"]
    negative_slope = prepared["negative_slope"]

    x = jnp.asarray(x, jnp.float32)
    B, d_in = x.shape

    # ---------- generation-aware tile / VMEM budgeting ----------
    vmem_cap = _vmem_capacity_bytes()
    vmem_usable = max(vmem_cap - (12 << 20), 16 << 20)   # leave compiler headroom

    weight_bytes = 4 * (int(w_cat.size) + int(w_last.size) + int(su_last.size)
                        + sum(int(s.size) for s in su_hidden))

    def _tile_bytes(t):
        # double-buffered x/out tiles + (double-buffered) resident weights +
        # intermediates (xw, z, temporaries) + slack.
        out_elems = t if out_dim == 1 else t * out_dim
        io = 2 * 4 * t * d_in + 2 * 4 * out_elems
        inter = 4 * t * (sum(hidden_sizes) + 2 * max(hidden_sizes))
        return io + 2 * weight_bytes + inter + (2 << 20)

    # Single-TC chips (v5e/v6e): one (or very few) maximal batch tiles.
    tb_eff = max(8, min(_round_up(int(tb), 8), _round_up(B, 8)))
    # v7x: force >= 2 tiles so both TensorCores get work on the "parallel" axis.
    if _num_tensorcores_per_chip() >= 2 and B >= 16:
        tb_eff = min(tb_eff, _round_up((B + 1) // 2, 8))
    # Shrink the tile until it fits the per-TC VMEM budget.
    while tb_eff > 8 and _tile_bytes(tb_eff) > vmem_usable:
        tb_eff = max(8, _round_up(tb_eff // 2, 8))
    vmem_limit = int(min(max(2 * _tile_bytes(tb_eff), 16 << 20), vmem_usable))

    Bp = _round_up(B, tb_eff)
    if Bp != B:
        x = jnp.pad(x, ((0, Bp - B), (0, 0)))   # zero rows -> exactly zero outputs
    num_tiles = Bp // tb_eff
    grid = (num_tiles,)

    kernel = _make_kernel(hidden_sizes, out_dim, negative_slope, eps)

    def _resident(a):   # whole array VMEM-resident, constant block index -> fetched once
        return pl.BlockSpec(a.shape, lambda i: (0,) * a.ndim)

    in_specs = ([pl.BlockSpec((tb_eff, d_in), lambda i: (i, 0)),
                 _resident(w_cat), _resident(w_last), _resident(su_last)]
                + [_resident(s) for s in su_hidden])

    if out_dim == 1:
        # Lane-dense output: one dense (1, tb) row per grid step.
        out_shape = jax.ShapeDtypeStruct((num_tiles, 1, tb_eff), jnp.float32)
        out_specs = pl.BlockSpec((None, 1, tb_eff), lambda i: (i, 0, 0))
    else:
        out_shape = jax.ShapeDtypeStruct((Bp, out_dim), jnp.float32)
        out_specs = pl.BlockSpec((tb_eff, out_dim), lambda i: (i, 0))

    out = pl.pallas_call(
        kernel,
        out_shape=out_shape,
        grid=grid,
        in_specs=in_specs,
        out_specs=out_specs,
        compiler_params=pltpu.CompilerParams(
            dimension_semantics=("parallel",),   # megacore sharding on v7x, no-op elsewhere
            vmem_limit_bytes=vmem_limit),
    )(x, w_cat, w_last, su_last, *su_hidden)

    if out_dim == 1:
        return out.reshape(Bp)[:B][:, None]
    return out[:B]


def _kaiming_uniform_a_sqrt5(key, shape):
    # nn.init.kaiming_uniform_(W, a=sqrt(5)) on (out, in): bound = 1/sqrt(fan_in)
    fan_in = shape[1]
    bound = 1.0 / math.sqrt(fan_in)
    return jax.random.uniform(key, shape, jnp.float32, -bound, bound)


if __name__ == "__main__":
    # Module-consistent small sizes; hidden widths are multiples of 128 so every
    # xw slice is lane-aligned.  B=256 gives 1 tile on v5e/v6e, 2 tiles on v7x.
    layer_sizes = [16, 128, 128, 1]
    eps, negative_slope = 0.1, 0.05
    B = 256

    key = jax.random.PRNGKey(0)
    n_keys = (len(layer_sizes) - 1) + (len(layer_sizes) - 2) + 1
    keys = jax.random.split(key, n_keys)
    ki = 0

    Ws = []
    for l in layer_sizes[1:]:
        Ws.append(_kaiming_uniform_a_sqrt5(keys[ki], (l, layer_sizes[0])))
        ki += 1
    Us = []
    for i in range(1, len(layer_sizes) - 1):
        Us.append(_kaiming_uniform_a_sqrt5(keys[ki], (layer_sizes[i + 1], layer_sizes[i])))
        ki += 1

    x = jax.random.normal(keys[ki], (B, layer_sizes[0]), jnp.float32)

    prepared = prepare_posdef_icnn_params(Ws, Us, negative_slope)   # one-time prep
    out = posdef_icnn_forward(x, prepared, eps=eps, tb=1024)
    out = jax.block_until_ready(out)

    # pure-JAX reference (mirrors the PyTorch forward exactly); full f32 matmuls
    # so the comparison is not polluted by XLA's default bf16 matmul precision.
    def reference(x):
        ns = negative_slope
        with jax.default_matmul_precision("highest"):
            z = x @ Ws[0].T
            z = jnp.where(z >= 0, z, ns * z)
            for W, U in zip(Ws[1:-1], Us[:-1]):
                z = x @ W.T + (z @ jax.nn.softplus(U).T) * ns
                z = jnp.where(z >= 0, z, ns * z)
            z = x @ Ws[-1].T + z @ jax.nn.softplus(Us[-1]).T
            return jnp.maximum(z, 0.0) + eps * jnp.sum(x ** 2, axis=1)[:, None]

    ref = reference(x)
    assert out.shape == (B, layer_sizes[-1])
    assert jnp.allclose(out, ref, atol=1e-4, rtol=1e-4), (out, ref)
    print("KERNEL_OK")
</pallas_src>

<mosaic_0001>
module attributes {stable_mosaic.version = 11 : i64} {
  func.func @kernel(%arg0: i32, %arg1: memref<256x16xf32, #tpu.memory_space<vmem>>, %arg2: memref<16x256xf32, #tpu.memory_space<vmem>>, %arg3: memref<1x16xf32, #tpu.memory_space<vmem>>, %arg4: memref<1x128xf32, #tpu.memory_space<vmem>>, %arg5: memref<128x128xf32, #tpu.memory_space<vmem>>, %arg6: memref<1x1x256xf32, #tpu.memory_space<vmem>>) attributes {dimension_semantics = [#tpu.dimension_semantics<parallel>], iteration_bounds = array<i64: 1>, scalar_prefetch = 0 : i64, scratch_operands = 0 : i64, tpu.core_type = #tpu.core_type<tc>, window_params = [{transform_indices = @transform_0, window_bounds = array<i64: 256, 16>}, {pipeline_mode = #tpu.pipeline_mode<synchronous>, transform_indices = @transform_1, window_bounds = array<i64: 16, 256>}, {pipeline_mode = #tpu.pipeline_mode<synchronous>, transform_indices = @transform_2, window_bounds = array<i64: 1, 16>}, {pipeline_mode = #tpu.pipeline_mode<synchronous>, transform_indices = @transform_3, window_bounds = array<i64: 1, 128>}, {pipeline_mode = #tpu.pipeline_mode<synchronous>, transform_indices = @transform_4, window_bounds = array<i64: 128, 128>}, {transform_indices = @transform_5, window_bounds = array<i64: 1, 1, 256>}]} {
    %c0 = arith.constant 0 : index
    %c0_0 = arith.constant 0 : index
    %0 = vector.load %arg1[%c0, %c0_0] : memref<256x16xf32, #tpu.memory_space<vmem>>, vector<256x16xf32>
    %c0_1 = arith.constant 0 : index
    %c0_2 = arith.constant 0 : index
    %1 = vector.load %arg2[%c0_1, %c0_2] : memref<16x256xf32, #tpu.memory_space<vmem>>, vector<16x256xf32>
    %cst = arith.constant dense<0.000000e+00> : vector<256x256xf32>
    %2 = tpu.matmul %0, %1, %cst {dimension_numbers = #tpu.dot_dimension_numbers<[1], [0], [0], [1], [0, 0, 1, 1], [], []>} : vector<256x16xf32>, vector<16x256xf32>, vector<256x256xf32> -> vector<256x256xf32>
    %3 = vector.extract_strided_slice %2 {offsets = [0, 0], sizes = [256, 128], strides = [1, 1]} : vector<256x256xf32> to vector<256x128xf32>
    %cst_3 = arith.constant 0.000000e+00 : f32
    %4 = vector.broadcast %cst_3 : f32 to vector<256x128xf32>
    %5 = arith.cmpf oge, %3, %4 : vector<256x128xf32>
    %cst_4 = arith.constant 5.000000e-02 : f32
    %6 = vector.broadcast %cst_4 : f32 to vector<256x128xf32>
    %7 = arith.mulf %6, %3 : vector<256x128xf32>
    %8 = arith.select %5, %3, %7 : vector<256x128xi1>, vector<256x128xf32>
    %9 = vector.extract_strided_slice %2 {offsets = [0, 128], sizes = [256, 128], strides = [1, 1]} : vector<256x256xf32> to vector<256x128xf32>
    %c0_5 = arith.constant 0 : index
    %c0_6 = arith.constant 0 : index
    %10 = vector.load %arg5[%c0_5, %c0_6] : memref<128x128xf32, #tpu.memory_space<vmem>>, vector<128x128xf32>
    %cst_7 = arith.constant dense<0.000000e+00> : vector<256x128xf32>
    %11 = tpu.matmul %8, %10, %cst_7 {dimension_numbers = #tpu.dot_dimension_numbers<[1], [0], [0], [1], [0, 0, 1, 1], [], []>} : vector<256x128xf32>, vector<128x128xf32>, vector<256x128xf32> -> vector<256x128xf32>
    %12 = arith.addf %9, %11 : vector<256x128xf32>
    %cst_8 = arith.constant 0.000000e+00 : f32
    %13 = vector.broadcast %cst_8 : f32 to vector<256x128xf32>
    %14 = arith.cmpf oge, %12, %13 : vector<256x128xf32>
    %cst_9 = arith.constant 5.000000e-02 : f32
    %15 = vector.broadcast %cst_9 : f32 to vector<256x128xf32>
    %16 = arith.mulf %15, %12 : vector<256x128xf32>
    %17 = arith.select %14, %12, %16 : vector<256x128xi1>, vector<256x128xf32>
    %c0_10 = arith.constant 0 : index
    %c0_11 = arith.constant 0 : index
    %18 = vector.load %arg3[%c0_10, %c0_11] : memref<1x16xf32, #tpu.memory_space<vmem>>, vector<1x16xf32>
    %cst_12 = arith.constant dense<0.000000e+00> : vector<1x256xf32>
    %19 = tpu.matmul %18, %0, %cst_12 {dimension_numbers = #tpu.dot_dimension_numbers<[1], [1], [0], [0], [0, 0, 1, 0], [], []>} : vector<1x16xf32>, vector<256x16xf32>, vector<1x256xf32> -> vector<1x256xf32>
    %c0_13 = arith.constant 0 : index
    %c0_14 = arith.constant 0 : index
    %20 = vector.load %arg4[%c0_13, %c0_14] : memref<1x128xf32, #tpu.memory_space<vmem>>, vector<1x128xf32>
    %cst_15 = arith.constant dense<0.000000e+00> : vector<1x256xf32>
    %21 = tpu.matmul %20, %17, %cst_15 {dimension_numbers = #tpu.dot_dimension_numbers<[1], [1], [0], [0], [0, 0, 1, 0], [], []>} : vector<1x128xf32>, vector<256x128xf32>, vector<1x256xf32> -> vector<1x256xf32>
    %cst_16 = arith.constant 1.000000e-01 : f32
    %22 = vector.broadcast %cst_16 : f32 to vector<1x16xf32>
    %23 = arith.mulf %0, %0 : vector<256x16xf32>
    %cst_17 = arith.constant dense<0.000000e+00> : vector<1x256xf32>
    %24 = tpu.matmul %22, %23, %cst_17 {dimension_numbers = #tpu.dot_dimension_numbers<[1], [1], [0], [0], [0, 0, 1, 0], [], []>} : vector<1x16xf32>, vector<256x16xf32>, vector<1x256xf32> -> vector<1x256xf32>
    %25 = arith.addf %19, %21 : vector<1x256xf32>
    %cst_18 = arith.constant 0.000000e+00 : f32
    %26 = vector.broadcast %cst_18 : f32 to vector<1x256xf32>
    %27 = arith.maximumf %25, %26 : vector<1x256xf32>
    %28 = arith.addf %27, %24 : vector<1x256xf32>
    %c0_19 = arith.constant 0 : index
    %c0_20 = arith.constant 0 : index
    %c0_21 = arith.constant 0 : index
    %29 = vector.load %arg6[%c0_19, %c0_20, %c0_21] : memref<1x1x256xf32, #tpu.memory_space<vmem>>, vector<1x1x256xf32>
    %30 = vector.shape_cast %29 : vector<1x1x256xf32> to vector<1x256xf32>
    %31 = vector.shape_cast %28 : vector<1x256xf32> to vector<1x1x256xf32>
    tpu.vector_store %arg6[%c0_19, %c0_20, %c0_21], %31 {strides = array<i32>} : memref<1x1x256xf32, #tpu.memory_space<vmem>>, vector<1x1x256xf32>,
    return
  }
  func.func @transform_0(%arg0: i32) -> (i32, i32) {
    %c0_i32 = arith.constant 0 : i32
    %c0_i32_0 = arith.constant 0 : i32
    return %arg0, %c0_i32 : i32, i32
  }
  func.func @transform_1(%arg0: i32) -> (i32, i32) {
    %c0_i32 = arith.constant 0 : i32
    %c0_i32_0 = arith.constant 0 : i32
    %c0_i32_1 = arith.constant 0 : i32
    return %c0_i32, %c0_i32_0 : i32, i32
  }
  func.func @transform_2(%arg0: i32) -> (i32, i32) {
    %c0_i32 = arith.constant 0 : i32
    %c0_i32_0 = arith.constant 0 : i32
    %c0_i32_1 = arith.constant 0 : i32
    return %c0_i32, %c0_i32_0 : i32, i32
  }
  func.func @transform_3(%arg0: i32) -> (i32, i32) {
    %c0_i32 = arith.constant 0 : i32
    %c0_i32_0 = arith.constant 0 : i32
    %c0_i32_1 = arith.constant 0 : i32
    return %c0_i32, %c0_i32_0 : i32, i32
  }
  func.func @transform_4(%arg0: i32) -> (i32, i32) {
    %c0_i32 = arith.constant 0 : i32
    %c0_i32_0 = arith.constant 0 : i32
    %c0_i32_1 = arith.constant 0 : i32
    return %c0_i32, %c0_i32_0 : i32, i32
  }
  func.func @transform_5(%arg0: i32) -> (i32, i32, i32) {
    %c0_i32 = arith.constant 0 : i32
    %c0_i32_0 = arith.constant 0 : i32
    %c0_i32_1 = arith.constant 0 : i32
    return %arg0, %c0_i32, %c0_i32_0 : i32, i32, i32
  }
}

</mosaic_0001>

<llo_original>
// kernel: tpu_custom_call.1
$region0: #{tpu_custom_call.1}
  #allocation0 [shape = 'u32[]', space=smem, size = 0x4, offset = 0x4, fixed_abs, tag = 'smem constant byte address 0x4 - core index']
  #allocation1 [shape = 'u32[144,128]{1,0:T(1,128)}', space=vmem, size = 0x12000, scoped, tag = 'internal scratch']
  %s0 = inlined_call_operand.vmem [shape: f32[256,16], index: 0, kind: input, shape index: {}]
  %s1 = inlined_call_operand.vmem [shape: f32[16,256], index: 1, kind: input, shape index: {}]
  %s2 = inlined_call_operand.vmem [shape: f32[1,16], index: 2, kind: input, shape index: {}]
  %s3 = inlined_call_operand.vmem [shape: f32[1,128], index: 3, kind: input, shape index: {}]
  %s4 = inlined_call_operand.vmem [shape: f32[128,128], index: 4, kind: input, shape index: {}]
  %s5 = inlined_call_operand.hbm [shape: f32[1,1,256], index: 5, kind: output, shape index: {}]
  %s6 = sld [smem:[#allocation0]]
  $region30: #{tpu_custom_call.1} parent=0
    _
  %s8 = ssub.s32 1, %s6
  %s9 = scalar_select 0, %s8, %s6
  $region1: #{tpu_custom_call.1} parent=0
    #allocation2 [shape = 'u8[1024]{0}', space=vmem, size = 0x400, scoped, tag = 'output window, operand 0, single buffered']
    #allocation3 [shape = 's32[1]{0}', space=sflag, size = 0x4, scoped, tag = 'scoped memory for tpu_custom_call.1']
    %10 = vsyncpa [#allocation3], 0
    // Predicated region
    $region2: #{tpu_custom_call.1} parent=1 // pred_check
      _
    $region3: #{tpu_custom_call.1} parent=1 // pred_check_branch
      %12 = sbr.rel (0) target = $region5
    $region4: #{tpu_custom_call.1} parent=1 // pred_region
      _
    $region5: #{tpu_custom_call.1} parent=1 // pred_fallthru
      _
    // Predicated region
    $region6: #{tpu_custom_call.1} parent=1 // pred_check
      _
    $region7: #{tpu_custom_call.1} parent=1 // pred_check_branch
      %14 = sbr.rel (0) target = $region9
    $region8: #{tpu_custom_call.1} parent=1 // pred_region
      _
    $region9: #{tpu_custom_call.1} parent=1 // pred_fallthru
      _
    // Predicated region
    $region10: #{tpu_custom_call.1} parent=1 // pred_check
      _
    $region11: #{tpu_custom_call.1} parent=1 // pred_check_branch
      %16 = sbr.rel (0) target = $region13
    $region12: #{tpu_custom_call.1} parent=1 // pred_region
      _
    $region13: #{tpu_custom_call.1} parent=1 // pred_fallthru
      _
    // Predicated region
    $region14: #{tpu_custom_call.1} parent=1 // pred_check
      _
    $region15: #{tpu_custom_call.1} parent=1 // pred_check_branch
      %18 = sbr.rel (0) target = $region17
    $region16: #{tpu_custom_call.1} parent=1 // pred_region
      _
    $region17: #{tpu_custom_call.1} parent=1 // pred_fallthru
      _
    // Predicated region
    $region18: #{tpu_custom_call.1} parent=1 // pred_check
      _
    $region19: #{tpu_custom_call.1} parent=1 // pred_check_branch
      %20 = sbr.rel (0) target = $region21
    $region20: #{tpu_custom_call.1} parent=1 // pred_region
      _
    $region21: #{tpu_custom_call.1} parent=1 // pred_fallthru
      _
    %v21 = vld [vmem:[%s0] sm:$0xff]
    %v22 = vld [vmem:[%s0 + $0x8] sm:$0xff]
    %v23 = vld [vmem:[%s0 + $0x10] sm:$0xff]
    %v24 = vld [vmem:[%s0 + $0x18] sm:$0xff]
    %v25 = vld [vmem:[%s0 + $0x20] sm:$0xff]
    %v26 = vld [vmem:[%s0 + $0x28] sm:$0xff]
    %v27 = vld [vmem:[%s0 + $0x30] sm:$0xff]
    %v28 = vld [vmem:[%s0 + $0x38] sm:$0xff]
    %v29 = vld [vmem:[%s0 + $0x40] sm:$0xff]
    %v30 = vld [vmem:[%s0 + $0x48] sm:$0xff]
    %v31 = vld [vmem:[%s0 + $0x50] sm:$0xff]
    %v32 = vld [vmem:[%s0 + $0x58] sm:$0xff]
    %v33 = vld [vmem:[%s0 + $0x60] sm:$0xff]
    %v34 = vld [vmem:[%s0 + $0x68] sm:$0xff]
    %v35 = vld [vmem:[%s0 + $0x70] sm:$0xff]
    %v36 = vld [vmem:[%s0 + $0x78] sm:$0xff]
    %v37 = vld [vmem:[%s0 + $0x80] sm:$0xff]
    %v38 = vld [vmem:[%s0 + $0x88] sm:$0xff]
    %v39 = vld [vmem:[%s0 + $0x90] sm:$0xff]
    %v40 = vld [vmem:[%s0 + $0x98] sm:$0xff]
    %v41 = vld [vmem:[%s0 + $0xa0] sm:$0xff]
    %v42 = vld [vmem:[%s0 + $0xa8] sm:$0xff]
    %v43 = vld [vmem:[%s0 + $0xb0] sm:$0xff]
    %v44 = vld [vmem:[%s0 + $0xb8] sm:$0xff]
    %v45 = vld [vmem:[%s0 + $0xc0] sm:$0xff]
    %v46 = vld [vmem:[%s0 + $0xc8] sm:$0xff]
    %v47 = vld [vmem:[%s0 + $0xd0] sm:$0xff]
    %v48 = vld [vmem:[%s0 + $0xd8] sm:$0xff]
    %v49 = vld [vmem:[%s0 + $0xe0] sm:$0xff]
    %v50 = vld [vmem:[%s0 + $0xe8] sm:$0xff]
    %v51 = vld [vmem:[%s0 + $0xf0] sm:$0xff]
    %v52 = vld [vmem:[%s0 + $0xf8] sm:$0xff]
    %v53 = vld [vmem:[%s1] sm:$0xff]
    %v54 = vld [vmem:[%s1 + $0x8] sm:$0xff]
    %v55 = vld [vmem:[%s1 + $0x10] sm:$0xff]
    %v56 = vld [vmem:[%s1 + $0x18] sm:$0xff]
    %vm57 = vcmask 130048
    %v59 = vsel %vm57, %v21, 0
    %v62 = vsel %vm57, %v22, 0
    %v65 = vsel %vm57, %v23, 0
    %v68 = vsel %vm57, %v24, 0
    %v71 = vsel %vm57, %v25, 0
    %v74 = vsel %vm57, %v26, 0
    %v77 = vsel %vm57, %v27, 0
    %v80 = vsel %vm57, %v28, 0
    %v83 = vsel %vm57, %v29, 0
    %v86 = vsel %vm57, %v30, 0
    %v89 = vsel %vm57, %v31, 0
    %v92 = vsel %vm57, %v32, 0
    %v95 = vsel %vm57, %v33, 0
    %v98 = vsel %vm57, %v34, 0
    %v101 = vsel %vm57, %v35, 0
    %v104 = vsel %vm57, %v36, 0
    %v107 = vsel %vm57, %v37, 0
    %v110 = vsel %vm57, %v38, 0
    %v113 = vsel %vm57, %v39, 0
    %v116 = vsel %vm57, %v40, 0
    %v119 = vsel %vm57, %v41, 0
    %v122 = vsel %vm57, %v42, 0
    %v125 = vsel %vm57, %v43, 0
    %v128 = vsel %vm57, %v44, 0
    %v131 = vsel %vm57, %v45, 0
    %v134 = vsel %vm57, %v46, 0
    %v137 = vsel %vm57, %v47, 0
    %v140 = vsel %vm57, %v48, 0
    %v143 = vsel %vm57, %v49, 0
    %v146 = vsel %vm57, %v50, 0
    %v149 = vsel %vm57, %v51, 0
    %v152 = vsel %vm57, %v52, 0
    %154 = vmatprep.subr.mxu0 0.0
    %155 = vmatpush1.msra.mxu0 0.0
    %156 = vmatprep.subr.mxu0 0.0
    %157 = vmatpush1.msra.mxu0 0.0
    %158 = vmatprep.subr.mxu0 0.0
    %159 = vmatpush1.msra.mxu0 0.0
    %160 = vmatprep.subr.mxu0 0.0
    %161 = vmatpush1.msra.mxu0 0.0
    %162 = vmatprep.subr.mxu0 0.0
    %163 = vmatpush1.msra.mxu0 0.0
    %164 = vmatprep.subr.mxu0 0.0
    %165 = vmatpush1.msra.mxu0 0.0
    %166 = vmatprep.subr.mxu0 0.0
    %167 = vmatpush1.msra.mxu0 0.0
    %168 = vmatprep.subr.mxu0 0.0
    %169 = vmatpush1.msra.mxu0 0.0
    %170 = vmatprep.subr.mxu0 0.0
    %171 = vmatpush1.msra.mxu0 0.0
    %172 = vmatprep.subr.mxu0 0.0
    %173 = vmatpush1.msra.mxu0 0.0
    %174 = vmatprep.subr.mxu0 0.0
    %175 = vmatpush1.msra.mxu0 0.0
    %176 = vmatprep.subr.mxu0 0.0
    %177 = vmatpush1.msra.mxu0 0.0
    %178 = vmatprep.subr.mxu0 0.0
    %179 = vmatpush1.msra.mxu0 0.0
    %180 = vmatprep.subr.mxu0 0.0
    %181 = vmatpush1.msra.mxu0 0.0
    %182 = vmatprep.subr.mxu0 %v56
    %183 = vmatpush1.msra.mxu0 %v55
    %184 = vmatprep.subr.mxu0 %v54
    %185 = vmatpush1.msra.mxu0 %v53
    %186 = vmatprep.subr.mxu0 0.0
    %187 = vmatpush2.msra.mxu0 0.0
    %188 = vmatprep.subr.mxu0 0.0
    %189 = vmatpush2.msra.mxu0 0.0
    %190 = vmatprep.subr.mxu0 0.0
    %191 = vmatpush2.msra.mxu0 0.0
    %192 = vmatprep.subr.mxu0 0.0
    %193 = vmatpush2.msra.mxu0 0.0
    %194 = vmatprep.subr.mxu0 0.0
    %195 = vmatpush2.msra.mxu0 0.0
    %196 = vmatprep.subr.mxu0 0.0
    %197 = vmatpush2.msra.mxu0 0.0
    %198 = vmatprep.subr.mxu0 0.0
    %199 = vmatpush2.msra.mxu0 0.0
    %200 = vmatprep.subr.mxu0 0.0
    %201 = vmatpush2.msra.mxu0 0.0
    %202 = vmatprep.subr.mxu0 0.0
    %203 = vmatpush2.msra.mxu0 0.0
    %204 = vmatprep.subr.mxu0 0.0
    %205 = vmatpush2.msra.mxu0 0.0
    %206 = vmatprep.subr.mxu0 0.0
    %207 = vmatpush2.msra.mxu0 0.0
    %208 = vmatprep.subr.mxu0 0.0
    %209 = vmatpush2.msra.mxu0 0.0
    %210 = vmatprep.subr.mxu0 0.0
    %211 = vmatpush2.msra.mxu0 0.0
    %212 = vmatprep.subr.mxu0 0.0
    %213 = vmatpush2.msra.mxu0 0.0
    %214 = vmatprep.subr.mxu0 0.0
    %215 = vmatpush2.msra.mxu0 0.0
    %216 = vmatprep.subr.mxu0 0.0
    %217 = vmatpush2.msra.mxu0 0.0
    %218 = vmatprep.mubr.f32.mxu0 0.0
    %219 = vmatmul.mubr.f32.gmra.mxu0 %v59
    %v220 = vpop.f32.mrf.mxu0
    %v221 = vadd.f32 0.0, %v220
    %v222 = vpop.f32.mrf.mxu0
    %v223 = vadd.f32 0.0, %v222
    %224 = vmatprep.mubr.f32.mxu0 0.0
    %225 = vmatmul.mubr.f32.gmra.mxu0 %v62
    %v226 = vpop.f32.mrf.mxu0
    %v227 = vadd.f32 0.0, %v226
    %v228 = vpop.f32.mrf.mxu0
    %v229 = vadd.f32 0.0, %v228
    %230 = vmatprep.mubr.f32.mxu0 0.0
    %231 = vmatmul.mubr.f32.gmra.mxu0 %v65
    %v232 = vpop.f32.mrf.mxu0
    %v233 = vadd.f32 0.0, %v232
    %v234 = vpop.f32.mrf.mxu0
    %v235 = vadd.f32 0.0, %v234
    %236 = vmatprep.mubr.f32.mxu0 0.0
    %237 = vmatmul.mubr.f32.gmra.mxu0 %v68
    %v238 = vpop.f32.mrf.mxu0
    %v239 = vadd.f32 0.0, %v238
    %v240 = vpop.f32.mrf.mxu0
    %v241 = vadd.f32 0.0, %v240
    %242 = vmatprep.mubr.f32.mxu0 0.0
    %243 = vmatmul.mubr.f32.gmra.mxu0 %v71
    %v244 = vpop.f32.mrf.mxu0
    %v245 = vadd.f32 0.0, %v244
    %v246 = vpop.f32.mrf.mxu0
    %v247 = vadd.f32 0.0, %v246
    %248 = vmatprep.mubr.f32.mxu0 0.0
    %249 = vmatmul.mubr.f32.gmra.mxu0 %v74
    %v250 = vpop.f32.mrf.mxu0
    %v251 = vadd.f32 0.0, %v250
    %v252 = vpop.f32.mrf.mxu0
    %v253 = vadd.f32 0.0, %v252
    %254 = vmatprep.mubr.f32.mxu0 0.0
    %255 = vmatmul.mubr.f32.gmra.mxu0 %v77
    %v256 = vpop.f32.mrf.mxu0
    %v257 = vadd.f32 0.0, %v256
    %v258 = vpop.f32.mrf.mxu0
    %v259 = vadd.f32 0.0, %v258
    %260 = vmatprep.mubr.f32.mxu0 0.0
    %261 = vmatmul.mubr.f32.gmra.mxu0 %v80
    %v262 = vpop.f32.mrf.mxu0
    %v263 = vadd.f32 0.0, %v262
    %v264 = vpop.f32.mrf.mxu0
    %v265 = vadd.f32 0.0, %v264
    %266 = vmatprep.mubr.f32.mxu0 0.0
    %267 = vmatmul.mubr.f32.gmra.mxu0 %v83
    %v268 = vpop.f32.mrf.mxu0
    %v269 = vadd.f32 0.0, %v268
    %v270 = vpop.f32.mrf.mxu0
    %v271 = vadd.f32 0.0, %v270
    %272 = vmatprep.mubr.f32.mxu0 0.0
    %273 = vmatmul.mubr.f32.gmra.mxu0 %v86
    %v274 = vpop.f32.mrf.mxu0
    %v275 = vadd.f32 0.0, %v274
    %v276 = vpop.f32.mrf.mxu0
    %v277 = vadd.f32 0.0, %v276
    %278 = vmatprep.mubr.f32.mxu0 0.0
    %279 = vmatmul.mubr.f32.gmra.mxu0 %v89
    %v280 = vpop.f32.mrf.mxu0
    %v281 = vadd.f32 0.0, %v280
    %v282 = vpop.f32.mrf.mxu0
    %v283 = vadd.f32 0.0, %v282
    %284 = vmatprep.mubr.f32.mxu0 0.0
    %285 = vmatmul.mubr.f32.gmra.mxu0 %v92
    %v286 = vpop.f32.mrf.mxu0
    %v287 = vadd.f32 0.0, %v286
    %v288 = vpop.f32.mrf.mxu0
    %v289 = vadd.f32 0.0, %v288
    %290 = vmatprep.mubr.f32.mxu0 0.0
    %291 = vmatmul.mubr.f32.gmra.mxu0 %v95
    %v292 = vpop.f32.mrf.mxu0
    %v293 = vadd.f32 0.0, %v292
    %v294 = vpop.f32.mrf.mxu0
    %v295 = vadd.f32 0.0, %v294
    %296 = vmatprep.mubr.f32.mxu0 0.0
    %297 = vmatmul.mubr.f32.gmra.mxu0 %v98
    %v298 = vpop.f32.mrf.mxu0
    %v299 = vadd.f32 0.0, %v298
    %v300 = vpop.f32.mrf.mxu0
    %v301 = vadd.f32 0.0, %v300
    %302 = vmatprep.mubr.f32.mxu0 0.0
    %303 = vmatmul.mubr.f32.gmra.mxu0 %v101
    %v304 = vpop.f32.mrf.mxu0
    %v305 = vadd.f32 0.0, %v304
    %v306 = vpop.f32.mrf.mxu0
    %v307 = vadd.f32 0.0, %v306
    %308 = vmatprep.mubr.f32.mxu0 0.0
    %309 = vmatmul.mubr.f32.gmra.mxu0 %v104
    %v310 = vpop.f32.mrf.mxu0
    %v311 = vadd.f32 0.0, %v310
    %v312 = vpop.f32.mrf.mxu0
    %v313 = vadd.f32 0.0, %v312
    %314 = vmatprep.mubr.f32.mxu0 0.0
    %315 = vmatmul.mubr.f32.gmra.mxu0 %v107
    %v316 = vpop.f32.mrf.mxu0
    %v317 = vadd.f32 0.0, %v316
    %v318 = vpop.f32.mrf.mxu0
    %v319 = vadd.f32 0.0, %v318
    %320 = vmatprep.mubr.f32.mxu0 0.0
    %321 = vmatmul.mubr.f32.gmra.mxu0 %v110
    %v322 = vpop.f32.mrf.mxu0
    %v323 = vadd.f32 0.0, %v322
    %v324 = vpop.f32.mrf.mxu0
    %v325 = vadd.f32 0.0, %v324
    %326 = vmatprep.mubr.f32.mxu0 0.0
    %327 = vmatmul.mubr.f32.gmra.mxu0 %v113
    %v328 = vpop.f32.mrf.mxu0
    %v329 = vadd.f32 0.0, %v328
    %v330 = vpop.f32.mrf.mxu0
    %v331 = vadd.f32 0.0, %v330
    %332 = vmatprep.mubr.f32.mxu0 0.0
    %333 = vmatmul.mubr.f32.gmra.mxu0 %v116
    %v334 = vpop.f32.mrf.mxu0
    %v335 = vadd.f32 0.0, %v334
    %v336 = vpop.f32.mrf.mxu0
    %v337 = vadd.f32 0.0, %v336
    %338 = vmatprep.mubr.f32.mxu0 0.0
    %339 = vmatmul.mubr.f32.gmra.mxu0 %v119
    %v340 = vpop.f32.mrf.mxu0
    %v341 = vadd.f32 0.0, %v340
    %v342 = vpop.f32.mrf.mxu0
    %v343 = vadd.f32 0.0, %v342
    %344 = vmatprep.mubr.f32.mxu0 0.0
    %345 = vmatmul.mubr.f32.gmra.mxu0 %v122
    %v346 = vpop.f32.mrf.mxu0
    %v347 = vadd.f32 0.0, %v346
    %v348 = vpop.f32.mrf.mxu0
    %v349 = vadd.f32 0.0, %v348
    %350 = vmatprep.mubr.f32.mxu0 0.0
    %351 = vmatmul.mubr.f32.gmra.mxu0 %v125
    %v352 = vpop.f32.mrf.mxu0
    %v353 = vadd.f32 0.0, %v352
    %v354 = vpop.f32.mrf.mxu0
    %v355 = vadd.f32 0.0, %v354
    %356 = vmatprep.mubr.f32.mxu0 0.0
    %357 = vmatmul.mubr.f32.gmra.mxu0 %v128
    %v358 = vpop.f32.mrf.mxu0
    %v359 = vadd.f32 0.0, %v358
    %v360 = vpop.f32.mrf.mxu0
    %v361 = vadd.f32 0.0, %v360
    %362 = vmatprep.mubr.f32.mxu0 0.0
    %363 = vmatmul.mubr.f32.gmra.mxu0 %v131
    %v364 = vpop.f32.mrf.mxu0
    %v365 = vadd.f32 0.0, %v364
    %v366 = vpop.f32.mrf.mxu0
    %v367 = vadd.f32 0.0, %v366
    %368 = vmatprep.mubr.f32.mxu0 0.0
    %369 = vmatmul.mubr.f32.gmra.mxu0 %v134
    %v370 = vpop.f32.mrf.mxu0
    %v371 = vadd.f32 0.0, %v370
    %v372 = vpop.f32.mrf.mxu0
    %v373 = vadd.f32 0.0, %v372
    %374 = vmatprep.mubr.f32.mxu0 0.0
    %375 = vmatmul.mubr.f32.gmra.mxu0 %v137
    %v376 = vpop.f32.mrf.mxu0
    %v377 = vadd.f32 0.0, %v376
    %v378 = vpop.f32.mrf.mxu0
    %v379 = vadd.f32 0.0, %v378
    %380 = vmatprep.mubr.f32.mxu0 0.0
    %381 = vmatmul.mubr.f32.gmra.mxu0 %v140
    %v382 = vpop.f32.mrf.mxu0
    %v383 = vadd.f32 0.0, %v382
    %v384 = vpop.f32.mrf.mxu0
    %v385 = vadd.f32 0.0, %v384
    %386 = vmatprep.mubr.f32.mxu0 0.0
    %387 = vmatmul.mubr.f32.gmra.mxu0 %v143
    %v388 = vpop.f32.mrf.mxu0
    %v389 = vadd.f32 0.0, %v388
    %v390 = vpop.f32.mrf.mxu0
    %v391 = vadd.f32 0.0, %v390
    %392 = vmatprep.mubr.f32.mxu0 0.0
    %393 = vmatmul.mubr.f32.gmra.mxu0 %v146
    %v394 = vpop.f32.mrf.mxu0
    %v395 = vadd.f32 0.0, %v394
    %v396 = vpop.f32.mrf.mxu0
    %v397 = vadd.f32 0.0, %v396
    %398 = vmatprep.mubr.f32.mxu0 0.0
    %399 = vmatmul.mubr.f32.gmra.mxu0 %v149
    %v400 = vpop.f32.mrf.mxu0
    %v401 = vadd.f32 0.0, %v400
    %v402 = vpop.f32.mrf.mxu0
    %v403 = vadd.f32 0.0, %v402
    %404 = vmatprep.mubr.f32.mxu0 0.0
    %405 = vmatmul.mubr.f32.gmra.mxu0 %v152
    %v406 = vpop.f32.mrf.mxu0
    %v407 = vadd.f32 0.0, %v406
    %v408 = vpop.f32.mrf.mxu0
    %v409 = vadd.f32 0.0, %v408
    %410 = vdwg.mxu0
    %vm411 = vcmp.ge.f32.partialorder %v221, 0.0
    %vm412 = vcmp.ge.f32.partialorder %v227, 0.0
    %vm413 = vcmp.ge.f32.partialorder %v233, 0.0
    %vm414 = vcmp.ge.f32.partialorder %v239, 0.0
    %vm415 = vcmp.ge.f32.partialorder %v245, 0.0
    %vm416 = vcmp.ge.f32.partialorder %v251, 0.0
    %vm417 = vcmp.ge.f32.partialorder %v257, 0.0
    %vm418 = vcmp.ge.f32.partialorder %v263, 0.0
    %vm419 = vcmp.ge.f32.partialorder %v269, 0.0
    %vm420 = vcmp.ge.f32.partialorder %v275, 0.0
    %vm421 = vcmp.ge.f32.partialorder %v281, 0.0
    %vm422 = vcmp.ge.f32.partialorder %v287, 0.0
    %vm423 = vcmp.ge.f32.partialorder %v293, 0.0
    %vm424 = vcmp.ge.f32.partialorder %v299, 0.0
    %vm425 = vcmp.ge.f32.partialorder %v305, 0.0
    %vm426 = vcmp.ge.f32.partialorder %v311, 0.0
    %vm427 = vcmp.ge.f32.partialorder %v317, 0.0
    %vm428 = vcmp.ge.f32.partialorder %v323, 0.0
    %vm429 = vcmp.ge.f32.partialorder %v329, 0.0
    %vm430 = vcmp.ge.f32.partialorder %v335, 0.0
    %vm431 = vcmp.ge.f32.partialorder %v341, 0.0
    %vm432 = vcmp.ge.f32.partialorder %v347, 0.0
    %vm433 = vcmp.ge.f32.partialorder %v353, 0.0
    %vm434 = vcmp.ge.f32.partialorder %v359, 0.0
    %vm435 = vcmp.ge.f32.partialorder %v365, 0.0
    %vm436 = vcmp.ge.f32.partialorder %v371, 0.0
    %vm437 = vcmp.ge.f32.partialorder %v377, 0.0
    %vm438 = vcmp.ge.f32.partialorder %v383, 0.0
    %vm439 = vcmp.ge.f32.partialorder %v389, 0.0
    %vm440 = vcmp.ge.f32.partialorder %v395, 0.0
    %vm441 = vcmp.ge.f32.partialorder %v401, 0.0
    %vm442 = vcmp.ge.f32.partialorder %v407, 0.0
    %v443 = vmul.f32 %v221, 0.05
    %v444 = vmul.f32 %v227, 0.05
    %v445 = vmul.f32 %v233, 0.05
    %v446 = vmul.f32 %v239, 0.05
    %v447 = vmul.f32 %v245, 0.05
    %v448 = vmul.f32 %v251, 0.05
    %v449 = vmul.f32 %v257, 0.05
    %v450 = vmul.f32 %v263, 0.05
    %v451 = vmul.f32 %v269, 0.05
    %v452 = vmul.f32 %v275, 0.05
    %v453 = vmul.f32 %v281, 0.05
    %v454 = vmul.f32 %v287, 0.05
    %v455 = vmul.f32 %v293, 0.05
    %v456 = vmul.f32 %v299, 0.05
    %v457 = vmul.f32 %v305, 0.05
    %v458 = vmul.f32 %v311, 0.05
    %v459 = vmul.f32 %v317, 0.05
    %v460 = vmul.f32 %v323, 0.05
    %v461 = vmul.f32 %v329, 0.05
    %v462 = vmul.f32 %v335, 0.05
    %v463 = vmul.f32 %v341, 0.05
    %v464 = vmul.f32 %v347, 0.05
    %v465 = vmul.f32 %v353, 0.05
    %v466 = vmul.f32 %v359, 0.05
    %v467 = vmul.f32 %v365, 0.05
    %v468 = vmul.f32 %v371, 0.05
    %v469 = vmul.f32 %v377, 0.05
    %v470 = vmul.f32 %v383, 0.05
    %v471 = vmul.f32 %v389, 0.05
    %v472 = vmul.f32 %v395, 0.05
    %v473 = vmul.f32 %v401, 0.05
    %v474 = vmul.f32 %v407, 0.05
    %v475 = vsel %vm411, %v221, %v443
    %v476 = vsel %vm412, %v227, %v444
    %v477 = vsel %vm413, %v233, %v445
    %v478 = vsel %vm414, %v239, %v446
    %v479 = vsel %vm415, %v245, %v447
    %v480 = vsel %vm416, %v251, %v448
    %v481 = vsel %vm417, %v257, %v449
    %v482 = vsel %vm418, %v263, %v450
    %v483 = vsel %vm419, %v269, %v451
    %v484 = vsel %vm420, %v275, %v452
    %v485 = vsel %vm421, %v281, %v453
    %v486 = vsel %vm422, %v287, %v454
    %v487 = vsel %vm423, %v293, %v455
    %v488 = vsel %vm424, %v299, %v456
    %v489 = vsel %vm425, %v305, %v457
    %v490 = vsel %vm426, %v311, %v458
    %v491 = vsel %vm427, %v317, %v459
    %v492 = vsel %vm428, %v323, %v460
    %v493 = vsel %vm429, %v329, %v461
    %v494 = vsel %vm430, %v335, %v462
    %v495 = vsel %vm431, %v341, %v463
    %v496 = vsel %vm432, %v347, %v464
    %v497 = vsel %vm433, %v353, %v465
    %v498 = vsel %vm434, %v359, %v466
    %v499 = vsel %vm435, %v365, %v467
    %v500 = vsel %vm436, %v371, %v468
    %v501 = vsel %vm437, %v377, %v469
    %v502 = vsel %vm438, %v383, %v470
    %v503 = vsel %vm439, %v389, %v471
    %v504 = vsel %vm440, %v395, %v472
    %v505 = vsel %vm441, %v401, %v473
    %v506 = vsel %vm442, %v407, %v474
    %v507 = vld [vmem:[%s4] sm:$0xff]
    %v508 = vld [vmem:[%s4 + $0x8] sm:$0xff]
    %v509 = vld [vmem:[%s4 + $0x10] sm:$0xff]
    %v510 = vld [vmem:[%s4 + $0x18] sm:$0xff]
    %v511 = vld [vmem:[%s4 + $0x20] sm:$0xff]
    %v512 = vld [vmem:[%s4 + $0x28] sm:$0xff]
    %v513 = vld [vmem:[%s4 + $0x30] sm:$0xff]
    %v514 = vld [vmem:[%s4 + $0x38] sm:$0xff]
    %v515 = vld [vmem:[%s4 + $0x40] sm:$0xff]
    %v516 = vld [vmem:[%s4 + $0x48] sm:$0xff]
    %v517 = vld [vmem:[%s4 + $0x50] sm:$0xff]
    %v518 = vld [vmem:[%s4 + $0x58] sm:$0xff]
    %v519 = vld [vmem:[%s4 + $0x60] sm:$0xff]
    %v520 = vld [vmem:[%s4 + $0x68] sm:$0xff]
    %v521 = vld [vmem:[%s4 + $0x70] sm:$0xff]
    %v522 = vld [vmem:[%s4 + $0x78] sm:$0xff]
    %523 = vmatprep.subr.mxu0 0.0
    %524 = vmatpush1.msra.mxu0 %v522
    %525 = vmatprep.subr.mxu0 0.0
    %526 = vmatpush1.msra.mxu0 %v521
    %527 = vmatprep.subr.mxu0 0.0
    %528 = vmatpush1.msra.mxu0 %v520
    %529 = vmatprep.subr.mxu0 0.0
    %530 = vmatpush1.msra.mxu0 %v519
    %531 = vmatprep.subr.mxu0 0.0
    %532 = vmatpush1.msra.mxu0 %v518
    %533 = vmatprep.subr.mxu0 0.0
    %534 = vmatpush1.msra.mxu0 %v517
    %535 = vmatprep.subr.mxu0 0.0
    %536 = vmatpush1.msra.mxu0 %v516
    %537 = vmatprep.subr.mxu0 0.0
    %538 = vmatpush1.msra.mxu0 %v515
    %539 = vmatprep.subr.mxu0 0.0
    %540 = vmatpush1.msra.mxu0 %v514
    %541 = vmatprep.subr.mxu0 0.0
    %542 = vmatpush1.msra.mxu0 %v513
    %543 = vmatprep.subr.mxu0 0.0
    %544 = vmatpush1.msra.mxu0 %v512
    %545 = vmatprep.subr.mxu0 0.0
    %546 = vmatpush1.msra.mxu0 %v511
    %547 = vmatprep.subr.mxu0 0.0
    %548 = vmatpush1.msra.mxu0 %v510
    %549 = vmatprep.subr.mxu0 0.0
    %550 = vmatpush1.msra.mxu0 %v509
    %551 = vmatprep.subr.mxu0 0.0
    %552 = vmatpush1.msra.mxu0 %v508
    %553 = vmatprep.subr.mxu0 0.0
    %554 = vmatpush1.msra.mxu0 %v507
    %555 = vmatprep.subr.mxu0 0.0
    %556 = vmatpush2.msra.mxu0 0.0
    %557 = vmatprep.subr.mxu0 0.0
    %558 = vmatpush2.msra.mxu0 0.0
    %559 = vmatprep.subr.mxu0 0.0
    %560 = vmatpush2.msra.mxu0 0.0
    %561 = vmatprep.subr.mxu0 0.0
    %562 = vmatpush2.msra.mxu0 0.0
    %563 = vmatprep.subr.mxu0 0.0
    %564 = vmatpush2.msra.mxu0 0.0
    %565 = vmatprep.subr.mxu0 0.0
    %566 = vmatpush2.msra.mxu0 0.0
    %567 = vmatprep.subr.mxu0 0.0
    %568 = vmatpush2.msra.mxu0 0.0
    %569 = vmatprep.subr.mxu0 0.0
    %570 = vmatpush2.msra.mxu0 0.0
    %571 = vmatprep.subr.mxu0 0.0
    %572 = vmatpush2.msra.mxu0 0.0
    %573 = vmatprep.subr.mxu0 0.0
    %574 = vmatpush2.msra.mxu0 0.0
    %575 = vmatprep.subr.mxu0 0.0
    %576 = vmatpush2.msra.mxu0 0.0
    %577 = vmatprep.subr.mxu0 0.0
    %578 = vmatpush2.msra.mxu0 0.0
    %579 = vmatprep.subr.mxu0 0.0
    %580 = vmatpush2.msra.mxu0 0.0
    %581 = vmatprep.subr.mxu0 0.0
    %582 = vmatpush2.msra.mxu0 0.0
    %583 = vmatprep.subr.mxu0 0.0
    %584 = vmatpush2.msra.mxu0 0.0
    %585 = vmatprep.subr.mxu0 0.0
    %586 = vmatpush2.msra.mxu0 0.0
    %587 = vmatprep.mubr.f32.mxu0 0.0
    %588 = vmatmul.mubr.f32.gmra.mxu0 %v475
    %v589 = vpop.f32.mrf.mxu0
    %v590 = vadd.f32 0.0, %v589
    %v591 = vpop.f32.mrf.mxu0
    %592 = vmatprep.mubr.f32.mxu0 0.0
    %593 = vmatmul.mubr.f32.gmra.mxu0 %v476
    %v594 = vpop.f32.mrf.mxu0
    %v595 = vadd.f32 0.0, %v594
    %v596 = vpop.f32.mrf.mxu0
    %597 = vmatprep.mubr.f32.mxu0 0.0
    %598 = vmatmul.mubr.f32.gmra.mxu0 %v477
    %v599 = vpop.f32.mrf.mxu0
    %v600 = vadd.f32 0.0, %v599
    %v601 = vpop.f32.mrf.mxu0
    %602 = vmatprep.mubr.f32.mxu0 0.0
    %603 = vmatmul.mubr.f32.gmra.mxu0 %v478
    %v604 = vpop.f32.mrf.mxu0
    %v605 = vadd.f32 0.0, %v604
    %v606 = vpop.f32.mrf.mxu0
    %607 = vmatprep.mubr.f32.mxu0 0.0
    %608 = vmatmul.mubr.f32.gmra.mxu0 %v479
    %v609 = vpop.f32.mrf.mxu0
    %v610 = vadd.f32 0.0, %v609
    %v611 = vpop.f32.mrf.mxu0
    %612 = vmatprep.mubr.f32.mxu0 0.0
    %613 = vmatmul.mubr.f32.gmra.mxu0 %v480
    %v614 = vpop.f32.mrf.mxu0
    %v615 = vadd.f32 0.0, %v614
    %v616 = vpop.f32.mrf.mxu0
    %617 = vmatprep.mubr.f32.mxu0 0.0
    %618 = vmatmul.mubr.f32.gmra.mxu0 %v481
    %v619 = vpop.f32.mrf.mxu0
    %v620 = vadd.f32 0.0, %v619
    %v621 = vpop.f32.mrf.mxu0
    %622 = vmatprep.mubr.f32.mxu0 0.0
    %623 = vmatmul.mubr.f32.gmra.mxu0 %v482
    %v624 = vpop.f32.mrf.mxu0
    %v625 = vadd.f32 0.0, %v624
    %v626 = vpop.f32.mrf.mxu0
    %627 = vmatprep.mubr.f32.mxu0 0.0
    %628 = vmatmul.mubr.f32.gmra.mxu0 %v483
    %v629 = vpop.f32.mrf.mxu0
    %v630 = vadd.f32 0.0, %v629
    %v631 = vpop.f32.mrf.mxu0
    %632 = vmatprep.mubr.f32.mxu0 0.0
    %633 = vmatmul.mubr.f32.gmra.mxu0 %v484
    %v634 = vpop.f32.mrf.mxu0
    %v635 = vadd.f32 0.0, %v634
    %v636 = vpop.f32.mrf.mxu0
    %637 = vmatprep.mubr.f32.mxu0 0.0
    %638 = vmatmul.mubr.f32.gmra.mxu0 %v485
    %v639 = vpop.f32.mrf.mxu0
    %v640 = vadd.f32 0.0, %v639
    %v641 = vpop.f32.mrf.mxu0
    %642 = vmatprep.mubr.f32.mxu0 0.0
    %643 = vmatmul.mubr.f32.gmra.mxu0 %v486
    %v644 = vpop.f32.mrf.mxu0
    %v645 = vadd.f32 0.0, %v644
    %v646 = vpop.f32.mrf.mxu0
    %647 = vmatprep.mubr.f32.mxu0 0.0
    %648 = vmatmul.mubr.f32.gmra.mxu0 %v487
    %v649 = vpop.f32.mrf.mxu0
    %v650 = vadd.f32 0.0, %v649
    %v651 = vpop.f32.mrf.mxu0
    %652 = vmatprep.mubr.f32.mxu0 0.0
    %653 = vmatmul.mubr.f32.gmra.mxu0 %v488
    %v654 = vpop.f32.mrf.mxu0
    %v655 = vadd.f32 0.0, %v654
    %v656 = vpop.f32.mrf.mxu0
    %657 = vmatprep.mubr.f32.mxu0 0.0
    %658 = vmatmul.mubr.f32.gmra.mxu0 %v489
    %v659 = vpop.f32.mrf.mxu0
    %v660 = vadd.f32 0.0, %v659
    %v661 = vpop.f32.mrf.mxu0
    %662 = vmatprep.mubr.f32.mxu0 0.0
    %663 = vmatmul.mubr.f32.gmra.mxu0 %v490
    %v664 = vpop.f32.mrf.mxu0
    %v665 = vadd.f32 0.0, %v664
    %v666 = vpop.f32.mrf.mxu0
    %667 = vmatprep.mubr.f32.mxu0 0.0
    %668 = vmatmul.mubr.f32.gmra.mxu0 %v491
    %v669 = vpop.f32.mrf.mxu0
    %v670 = vadd.f32 0.0, %v669
    %v671 = vpop.f32.mrf.mxu0
    %672 = vmatprep.mubr.f32.mxu0 0.0
    %673 = vmatmul.mubr.f32.gmra.mxu0 %v492
    %v674 = vpop.f32.mrf.mxu0
    %v675 = vadd.f32 0.0, %v674
    %v676 = vpop.f32.mrf.mxu0
    %677 = vmatprep.mubr.f32.mxu0 0.0
    %678 = vmatmul.mubr.f32.gmra.mxu0 %v493
    %v679 = vpop.f32.mrf.mxu0
    %v680 = vadd.f32 0.0, %v679
    %v681 = vpop.f32.mrf.mxu0
    %682 = vmatprep.mubr.f32.mxu0 0.0
    %683 = vmatmul.mubr.f32.gmra.mxu0 %v494
    %v684 = vpop.f32.mrf.mxu0
    %v685 = vadd.f32 0.0, %v684
    %v686 = vpop.f32.mrf.mxu0
    %687 = vmatprep.mubr.f32.mxu0 0.0
    %688 = vmatmul.mubr.f32.gmra.mxu0 %v495
    %v689 = vpop.f32.mrf.mxu0
    %v690 = vadd.f32 0.0, %v689
    %v691 = vpop.f32.mrf.mxu0
    %692 = vmatprep.mubr.f32.mxu0 0.0
    %693 = vmatmul.mubr.f32.gmra.mxu0 %v496
    %v694 = vpop.f32.mrf.mxu0
    %v695 = vadd.f32 0.0, %v694
    %v696 = vpop.f32.mrf.mxu0
    %697 = vmatprep.mubr.f32.mxu0 0.0
    %698 = vmatmul.mubr.f32.gmra.mxu0 %v497
    %v699 = vpop.f32.mrf.mxu0
    %v700 = vadd.f32 0.0, %v699
    %v701 = vpop.f32.mrf.mxu0
    %702 = vmatprep.mubr.f32.mxu0 0.0
    %703 = vmatmul.mubr.f32.gmra.mxu0 %v498
    %v704 = vpop.f32.mrf.mxu0
    %v705 = vadd.f32 0.0, %v704
    %v706 = vpop.f32.mrf.mxu0
    %707 = vmatprep.mubr.f32.mxu0 0.0
    %708 = vmatmul.mubr.f32.gmra.mxu0 %v499
    %v709 = vpop.f32.mrf.mxu0
    %v710 = vadd.f32 0.0, %v709
    %v711 = vpop.f32.mrf.mxu0
    %712 = vmatprep.mubr.f32.mxu0 0.0
    %713 = vmatmul.mubr.f32.gmra.mxu0 %v500
    %v714 = vpop.f32.mrf.mxu0
    %v715 = vadd.f32 0.0, %v714
    %v716 = vpop.f32.mrf.mxu0
    %717 = vmatprep.mubr.f32.mxu0 0.0
    %718 = vmatmul.mubr.f32.gmra.mxu0 %v501
    %v719 = vpop.f32.mrf.mxu0
    %v720 = vadd.f32 0.0, %v719
    %v721 = vpop.f32.mrf.mxu0
    %722 = vmatprep.mubr.f32.mxu0 0.0
    %723 = vmatmul.mubr.f32.gmra.mxu0 %v502
    %v724 = vpop.f32.mrf.mxu0
    %v725 = vadd.f32 0.0, %v724
    %v726 = vpop.f32.mrf.mxu0
    %727 = vmatprep.mubr.f32.mxu0 0.0
    %728 = vmatmul.mubr.f32.gmra.mxu0 %v503
    %v729 = vpop.f32.mrf.mxu0
    %v730 = vadd.f32 0.0, %v729
    %v731 = vpop.f32.mrf.mxu0
    %732 = vmatprep.mubr.f32.mxu0 0.0
    %733 = vmatmul.mubr.f32.gmra.mxu0 %v504
    %v734 = vpop.f32.mrf.mxu0
    %v735 = vadd.f32 0.0, %v734
    %v736 = vpop.f32.mrf.mxu0
    %737 = vmatprep.mubr.f32.mxu0 0.0
    %738 = vmatmul.mubr.f32.gmra.mxu0 %v505
    %v739 = vpop.f32.mrf.mxu0
    %v740 = vadd.f32 0.0, %v739
    %v741 = vpop.f32.mrf.mxu0
    %742 = vmatprep.mubr.f32.mxu0 0.0
    %743 = vmatmul.mubr.f32.gmra.mxu0 %v506
    %v744 = vpop.f32.mrf.mxu0
    %v745 = vadd.f32 0.0, %v744
    %v746 = vpop.f32.mrf.mxu0
    %747 = vdwg.mxu0
    %v748 = vadd.f32 %v223, %v590
    %v749 = vadd.f32 %v229, %v595
    %v750 = vadd.f32 %v235, %v600
    %v751 = vadd.f32 %v241, %v605
    %v752 = vadd.f32 %v247, %v610
    %v753 = vadd.f32 %v253, %v615
    %v754 = vadd.f32 %v259, %v620
    %v755 = vadd.f32 %v265, %v625
    %v756 = vadd.f32 %v271, %v630
    %v757 = vadd.f32 %v277, %v635
    %v758 = vadd.f32 %v283, %v640
    %v759 = vadd.f32 %v289, %v645
    %v760 = vadd.f32 %v295, %v650
    %v761 = vadd.f32 %v301, %v655
    %v762 = vadd.f32 %v307, %v660
    %v763 = vadd.f32 %v313, %v665
    %v764 = vadd.f32 %v319, %v670
    %v765 = vadd.f32 %v325, %v675
    %v766 = vadd.f32 %v331, %v680
    %v767 = vadd.f32 %v337, %v685
    %v768 = vadd.f32 %v343, %v690
    %v769 = vadd.f32 %v349, %v695
    %v770 = vadd.f32 %v355, %v700
    %v771 = vadd.f32 %v361, %v705
    %v772 = vadd.f32 %v367, %v710
    %v773 = vadd.f32 %v373, %v715
    %v774 = vadd.f32 %v379, %v720
    %v775 = vadd.f32 %v385, %v725
    %v776 = vadd.f32 %v391, %v730
    %v777 = vadd.f32 %v397, %v735
    %v778 = vadd.f32 %v403, %v740
    %v779 = vadd.f32 %v409, %v745
    %vm780 = vcmp.ge.f32.partialorder %v748, 0.0
    %vm781 = vcmp.ge.f32.partialorder %v749, 0.0
    %vm782 = vcmp.ge.f32.partialorder %v750, 0.0
    %vm783 = vcmp.ge.f32.partialorder %v751, 0.0
    %vm784 = vcmp.ge.f32.partialorder %v752, 0.0
    %vm785 = vcmp.ge.f32.partialorder %v753, 0.0
    %vm786 = vcmp.ge.f32.partialorder %v754, 0.0
    %vm787 = vcmp.ge.f32.partialorder %v755, 0.0
    %vm788 = vcmp.ge.f32.partialorder %v756, 0.0
    %vm789 = vcmp.ge.f32.partialorder %v757, 0.0
    %vm790 = vcmp.ge.f32.partialorder %v758, 0.0
    %vm791 = vcmp.ge.f32.partialorder %v759, 0.0
    %vm792 = vcmp.ge.f32.partialorder %v760, 0.0
    %vm793 = vcmp.ge.f32.partialorder %v761, 0.0
    %vm794 = vcmp.ge.f32.partialorder %v762, 0.0
    %vm795 = vcmp.ge.f32.partialorder %v763, 0.0
    %vm796 = vcmp.ge.f32.partialorder %v764, 0.0
    %vm797 = vcmp.ge.f32.partialorder %v765, 0.0
    %vm798 = vcmp.ge.f32.partialorder %v766, 0.0
    %vm799 = vcmp.ge.f32.partialorder %v767, 0.0
    %vm800 = vcmp.ge.f32.partialorder %v768, 0.0
    %vm801 = vcmp.ge.f32.partialorder %v769, 0.0
    %vm802 = vcmp.ge.f32.partialorder %v770, 0.0
    %vm803 = vcmp.ge.f32.partialorder %v771, 0.0
    %vm804 = vcmp.ge.f32.partialorder %v772, 0.0
    %vm805 = vcmp.ge.f32.partialorder %v773, 0.0
    %vm806 = vcmp.ge.f32.partialorder %v774, 0.0
    %vm807 = vcmp.ge.f32.partialorder %v775, 0.0
    %vm808 = vcmp.ge.f32.partialorder %v776, 0.0
    %vm809 = vcmp.ge.f32.partialorder %v777, 0.0
    %vm810 = vcmp.ge.f32.partialorder %v778, 0.0
    %vm811 = vcmp.ge.f32.partialorder %v779, 0.0
    %v812 = vmul.f32 %v748, 0.05
    %v813 = vmul.f32 %v749, 0.05
    %v814 = vmul.f32 %v750, 0.05
    %v815 = vmul.f32 %v751, 0.05
    %v816 = vmul.f32 %v752, 0.05
    %v817 = vmul.f32 %v753, 0.05
    %v818 = vmul.f32 %v754, 0.05
    %v819 = vmul.f32 %v755, 0.05
    %v820 = vmul.f32 %v756, 0.05
    %v821 = vmul.f32 %v757, 0.05
    %v822 = vmul.f32 %v758, 0.05
    %v823 = vmul.f32 %v759, 0.05
    %v824 = vmul.f32 %v760, 0.05
    %v825 = vmul.f32 %v761, 0.05
    %v826 = vmul.f32 %v762, 0.05
    %v827 = vmul.f32 %v763, 0.05
    %v828 = vmul.f32 %v764, 0.05
    %v829 = vmul.f32 %v765, 0.05
    %v830 = vmul.f32 %v766, 0.05
    %v831 = vmul.f32 %v767, 0.05
    %v832 = vmul.f32 %v768, 0.05
    %v833 = vmul.f32 %v769, 0.05
    %v834 = vmul.f32 %v770, 0.05
    %v835 = vmul.f32 %v771, 0.05
    %v836 = vmul.f32 %v772, 0.05
    %v837 = vmul.f32 %v773, 0.05
    %v838 = vmul.f32 %v774, 0.05
    %v839 = vmul.f32 %v775, 0.05
    %v840 = vmul.f32 %v776, 0.05
    %v841 = vmul.f32 %v777, 0.05
    %v842 = vmul.f32 %v778, 0.05
    %v843 = vmul.f32 %v779, 0.05
    %v844 = vsel %vm780, %v748, %v812
    %v845 = vsel %vm781, %v749, %v813
    %v846 = vsel %vm782, %v750, %v814
    %v847 = vsel %vm783, %v751, %v815
    %v848 = vsel %vm784, %v752, %v816
    %v849 = vsel %vm785, %v753, %v817
    %v850 = vsel %vm786, %v754, %v818
    %v851 = vsel %vm787, %v755, %v819
    %v852 = vsel %vm788, %v756, %v820
    %v853 = vsel %vm789, %v757, %v821
    %v854 = vsel %vm790, %v758, %v822
    %v855 = vsel %vm791, %v759, %v823
    %v856 = vsel %vm792, %v760, %v824
    %v857 = vsel %vm793, %v761, %v825
    %v858 = vsel %vm794, %v762, %v826
    %v859 = vsel %vm795, %v763, %v827
    %v860 = vsel %vm796, %v764, %v828
    %v861 = vsel %vm797, %v765, %v829
    %v862 = vsel %vm798, %v766, %v830
    %v863 = vsel %vm799, %v767, %v831
    %v864 = vsel %vm800, %v768, %v832
    %v865 = vsel %vm801, %v769, %v833
    %v866 = vsel %vm802, %v770, %v834
    %v867 = vsel %vm803, %v771, %v835
    %v868 = vsel %vm804, %v772, %v836
    %v869 = vsel %vm805, %v773, %v837
    %v870 = vsel %vm806, %v774, %v838
    %v871 = vsel %vm807, %v775, %v839
    %v872 = vsel %vm808, %v776, %v840
    %v873 = vsel %vm809, %v777, %v841
    %v874 = vsel %vm810, %v778, %v842
    %v875 = vsel %vm811, %v779, %v843
    %v876 = vld [vmem:[%s2] sm:$0x1]
    %v877 = vld [vmem:[%s3] sm:$0x1]
    %878 = vmatprep.subr.mxu0 0.0
    %879 = vmatpush1.xpose.msra.mxu0 %v859
    %880 = vmatprep.subr.mxu0 0.0
    %881 = vmatpush1.xpose.msra.mxu0 %v858
    %882 = vmatprep.subr.mxu0 0.0
    %883 = vmatpush1.xpose.msra.mxu0 %v857
    %884 = vmatprep.subr.mxu0 0.0
    %885 = vmatpush1.xpose.msra.mxu0 %v856
    %886 = vmatprep.subr.mxu0 0.0
    %887 = vmatpush1.xpose.msra.mxu0 %v855
    %888 = vmatprep.subr.mxu0 0.0
    %889 = vmatpush1.xpose.msra.mxu0 %v854
    %890 = vmatprep.subr.mxu0 0.0
    %891 = vmatpush1.xpose.msra.mxu0 %v853
    %892 = vmatprep.subr.mxu0 0.0
    %893 = vmatpush1.xpose.msra.mxu0 %v852
    %894 = vmatprep.subr.mxu0 0.0
    %895 = vmatpush1.xpose.msra.mxu0 %v851
    %896 = vmatprep.subr.mxu0 0.0
    %897 = vmatpush1.xpose.msra.mxu0 %v850
    %898 = vmatprep.subr.mxu0 0.0
    %899 = vmatpush1.xpose.msra.mxu0 %v849
    %900 = vmatprep.subr.mxu0 0.0
    %901 = vmatpush1.xpose.msra.mxu0 %v848
    %902 = vmatprep.subr.mxu0 0.0
    %903 = vmatpush1.xpose.msra.mxu0 %v847
    %904 = vmatprep.subr.mxu0 0.0
    %905 = vmatpush1.xpose.msra.mxu0 %v846
    %906 = vmatprep.subr.mxu0 0.0
    %907 = vmatpush1.xpose.msra.mxu0 %v845
    %908 = vmatprep.subr.mxu0 0.0
    %909 = vmatpush1.xpose.msra.mxu0 %v844
    %910 = vmatprep.subr.mxu0 0.0
    %911 = vmatpush2.xpose.msra.mxu0 %v875
    %912 = vmatprep.subr.mxu0 0.0
    %913 = vmatpush2.xpose.msra.mxu0 %v874
    %914 = vmatprep.subr.mxu0 0.0
    %915 = vmatpush2.xpose.msra.mxu0 %v873
    %916 = vmatprep.subr.mxu0 0.0
    %917 = vmatpush2.xpose.msra.mxu0 %v872
    %918 = vmatprep.subr.mxu0 0.0
    %919 = vmatpush2.xpose.msra.mxu0 %v871
    %920 = vmatprep.subr.mxu0 0.0
    %921 = vmatpush2.xpose.msra.mxu0 %v870
    %922 = vmatprep.subr.mxu0 0.0
    %923 = vmatpush2.xpose.msra.mxu0 %v869
    %924 = vmatprep.subr.mxu0 0.0
    %925 = vmatpush2.xpose.msra.mxu0 %v868
    %926 = vmatprep.subr.mxu0 0.0
    %927 = vmatpush2.xpose.msra.mxu0 %v867
    %928 = vmatprep.subr.mxu0 0.0
    %929 = vmatpush2.xpose.msra.mxu0 %v866
    %930 = vmatprep.subr.mxu0 0.0
    %931 = vmatpush2.xpose.msra.mxu0 %v865
    %932 = vmatprep.subr.mxu0 0.0
    %933 = vmatpush2.xpose.msra.mxu0 %v864
    %934 = vmatprep.subr.mxu0 0.0
    %935 = vmatpush2.xpose.msra.mxu0 %v863
    %936 = vmatprep.subr.mxu0 0.0
    %937 = vmatpush2.xpose.msra.mxu0 %v862
    %938 = vmatprep.subr.mxu0 0.0
    %939 = vmatpush2.xpose.msra.mxu0 %v861
    %940 = vmatprep.subr.mxu0 0.0
    %941 = vmatpush2.xpose.msra.mxu0 %v860
    %942 = vmatprep.mubr.f32.mxu0 0.0
    %943 = vmatmul.mubr.f32.gmra.mxu0 %v877
    %v944 = vpop.f32.mrf.mxu0
    %v945 = vadd.f32 0.0, %v944
    %v946 = vpop.f32.mrf.mxu0
    %v947 = vadd.f32 0.0, %v946
    %948 = vdwg.mxu0
    %v949 = vmul.f32 %v21, %v21
    %v950 = vmul.f32 %v22, %v22
    %v951 = vmul.f32 %v23, %v23
    %v952 = vmul.f32 %v24, %v24
    %v953 = vmul.f32 %v25, %v25
    %v954 = vmul.f32 %v26, %v26
    %v955 = vmul.f32 %v27, %v27
    %v956 = vmul.f32 %v28, %v28
    %v957 = vmul.f32 %v29, %v29
    %v958 = vmul.f32 %v30, %v30
    %v959 = vmul.f32 %v31, %v31
    %v960 = vmul.f32 %v32, %v32
    %v961 = vmul.f32 %v33, %v33
    %v962 = vmul.f32 %v34, %v34
    %v963 = vmul.f32 %v35, %v35
    %v964 = vmul.f32 %v36, %v36
    %v965 = vmul.f32 %v37, %v37
    %v966 = vmul.f32 %v38, %v38
    %v967 = vmul.f32 %v39, %v39
    %v968 = vmul.f32 %v40, %v40
    %v969 = vmul.f32 %v41, %v41
    %v970 = vmul.f32 %v42, %v42
    %v971 = vmul.f32 %v43, %v43
    %v972 = vmul.f32 %v44, %v44
    %v973 = vmul.f32 %v45, %v45
    %v974 = vmul.f32 %v46, %v46
    %v975 = vmul.f32 %v47, %v47
    %v976 = vmul.f32 %v48, %v48
    %v977 = vmul.f32 %v49, %v49
    %v978 = vmul.f32 %v50, %v50
    %v979 = vmul.f32 %v51, %v51
    %v980 = vmul.f32 %v52, %v52
    %v982 = vsel %vm57, 0.1, 0
    %v985 = vsel %vm57, %v949, 0
    %v988 = vsel %vm57, %v950, 0
    %v991 = vsel %vm57, %v951, 0
    %v994 = vsel %vm57, %v952, 0
    %v997 = vsel %vm57, %v953, 0
    %v1000 = vsel %vm57, %v954, 0
    %v1003 = vsel %vm57, %v955, 0
    %v1006 = vsel %vm57, %v956, 0
    %v1009 = vsel %vm57, %v957, 0
    %v1012 = vsel %vm57, %v958, 0
    %v1015 = vsel %vm57, %v959, 0
    %v1018 = vsel %vm57, %v960, 0
    %v1021 = vsel %vm57, %v961, 0
    %v1024 = vsel %vm57, %v962, 0
    %v1027 = vsel %vm57, %v963, 0
    %v1030 = vsel %vm57, %v964, 0
    %v1033 = vsel %vm57, %v965, 0
    %v1036 = vsel %vm57, %v966, 0
    %v1039 = vsel %vm57, %v967, 0
    %v1042 = vsel %vm57, %v968, 0
    %v1045 = vsel %vm57, %v969, 0
    %v1048 = vsel %vm57, %v970, 0
    %v1051 = vsel %vm57, %v971, 0
    %v1054 = vsel %vm57, %v972, 0
    %v1057 = vsel %vm57, %v973, 0
    %v1060 = vsel %vm57, %v974, 0
    %v1063 = vsel %vm57, %v975, 0
    %v1066 = vsel %vm57, %v976, 0
    %v1069 = vsel %vm57, %v977, 0
    %v1072 = vsel %vm57, %v978, 0
    %v1075 = vsel %vm57, %v979, 0
    %v1078 = vsel %vm57, %v980, 0
    %1080 = vmatprep.subr.mxu0 0.0
    %1081 = vmatpush1.xpose.msra.mxu0 %v1030
    %1082 = vmatprep.subr.mxu0 0.0
    %1083 = vmatpush1.xpose.msra.mxu0 %v1027
    %1084 = vmatprep.subr.mxu0 0.0
    %1085 = vmatpush1.xpose.msra.mxu0 %v1024
    %1086 = vmatprep.subr.mxu0 0.0
    %1087 = vmatpush1.xpose.msra.mxu0 %v1021
    %1088 = vmatprep.subr.mxu0 0.0
    %1089 = vmatpush1.xpose.msra.mxu0 %v1018
    %1090 = vmatprep.subr.mxu0 0.0
    %1091 = vmatpush1.xpose.msra.mxu0 %v1015
    %1092 = vmatprep.subr.mxu0 0.0
    %1093 = vmatpush1.xpose.msra.mxu0 %v1012
    %1094 = vmatprep.subr.mxu0 0.0
    %1095 = vmatpush1.xpose.msra.mxu0 %v1009
    %1096 = vmatprep.subr.mxu0 0.0
    %1097 = vmatpush1.xpose.msra.mxu0 %v1006
    %1098 = vmatprep.subr.mxu0 0.0
    %1099 = vmatpush1.xpose.msra.mxu0 %v1003
    %1100 = vmatprep.subr.mxu0 0.0
    %1101 = vmatpush1.xpose.msra.mxu0 %v1000
    %1102 = vmatprep.subr.mxu0 0.0
    %1103 = vmatpush1.xpose.msra.mxu0 %v997
    %1104 = vmatprep.subr.mxu0 0.0
    %1105 = vmatpush1.xpose.msra.mxu0 %v994
    %1106 = vmatprep.subr.mxu0 0.0
    %1107 = vmatpush1.xpose.msra.mxu0 %v991
    %1108 = vmatprep.subr.mxu0 0.0
    %1109 = vmatpush1.xpose.msra.mxu0 %v988
    %1110 = vmatprep.subr.mxu0 0.0
    %1111 = vmatpush1.xpose.msra.mxu0 %v985
    %1112 = vmatprep.subr.mxu0 0.0
    %1113 = vmatpush2.xpose.msra.mxu0 %v1078
    %1114 = vmatprep.subr.mxu0 0.0
    %1115 = vmatpush2.xpose.msra.mxu0 %v1075
    %1116 = vmatprep.subr.mxu0 0.0
    %1117 = vmatpush2.xpose.msra.mxu0 %v1072
    %1118 = vmatprep.subr.mxu0 0.0
    %1119 = vmatpush2.xpose.msra.mxu0 %v1069
    %1120 = vmatprep.subr.mxu0 0.0
    %1121 = vmatpush2.xpose.msra.mxu0 %v1066
    %1122 = vmatprep.subr.mxu0 0.0
    %1123 = vmatpush2.xpose.msra.mxu0 %v1063
    %1124 = vmatprep.subr.mxu0 0.0
    %1125 = vmatpush2.xpose.msra.mxu0 %v1060
    %1126 = vmatprep.subr.mxu0 0.0
    %1127 = vmatpush2.xpose.msra.mxu0 %v1057
    %1128 = vmatprep.subr.mxu0 0.0
    %1129 = vmatpush2.xpose.msra.mxu0 %v1054
    %1130 = vmatprep.subr.mxu0 0.0
    %1131 = vmatpush2.xpose.msra.mxu0 %v1051
    %1132 = vmatprep.subr.mxu0 0.0
    %1133 = vmatpush2.xpose.msra.mxu0 %v1048
    %1134 = vmatprep.subr.mxu0 0.0
    %1135 = vmatpush2.xpose.msra.mxu0 %v1045
    %1136 = vmatprep.subr.mxu0 0.0
    %1137 = vmatpush2.xpose.msra.mxu0 %v1042
    %1138 = vmatprep.subr.mxu0 0.0
    %1139 = vmatpush2.xpose.msra.mxu0 %v1039
    %1140 = vmatprep.subr.mxu0 0.0
    %1141 = vmatpush2.xpose.msra.mxu0 %v1036
    %1142 = vmatprep.subr.mxu0 0.0
    %1143 = vmatpush2.xpose.msra.mxu0 %v1033
    %1144 = vmatprep.mubr.f32.mxu0 0.0
    %1145 = vmatmul.mubr.f32.gmra.mxu0 %v982
    %v1146 = vpop.f32.mrf.mxu0
    %v1147 = vadd.f32 0.0, %v1146
    %v1148 = vpop.f32.mrf.mxu0
    %v1149 = vadd.f32 0.0, %v1148
    %1150 = vdwg.mxu0
    %v1152 = vsel %vm57, %v876, 0
    %1154 = vmatprep.subr.mxu0 0.0
    %1155 = vmatpush1.xpose.msra.mxu0 %v104
    %1156 = vmatprep.subr.mxu0 0.0
    %1157 = vmatpush1.xpose.msra.mxu0 %v101
    %1158 = vmatprep.subr.mxu0 0.0
    %1159 = vmatpush1.xpose.msra.mxu0 %v98
    %1160 = vmatprep.subr.mxu0 0.0
    %1161 = vmatpush1.xpose.msra.mxu0 %v95
    %1162 = vmatprep.subr.mxu0 0.0
    %1163 = vmatpush1.xpose.msra.mxu0 %v92
    %1164 = vmatprep.subr.mxu0 0.0
    %1165 = vmatpush1.xpose.msra.mxu0 %v89
    %1166 = vmatprep.subr.mxu0 0.0
    %1167 = vmatpush1.xpose.msra.mxu0 %v86
    %1168 = vmatprep.subr.mxu0 0.0
    %1169 = vmatpush1.xpose.msra.mxu0 %v83
    %1170 = vmatprep.subr.mxu0 0.0
    %1171 = vmatpush1.xpose.msra.mxu0 %v80
    %1172 = vmatprep.subr.mxu0 0.0
    %1173 = vmatpush1.xpose.msra.mxu0 %v77
    %1174 = vmatprep.subr.mxu0 0.0
    %1175 = vmatpush1.xpose.msra.mxu0 %v74
    %1176 = vmatprep.subr.mxu0 0.0
    %1177 = vmatpush1.xpose.msra.mxu0 %v71
    %1178 = vmatprep.subr.mxu0 0.0
    %1179 = vmatpush1.xpose.msra.mxu0 %v68
    %1180 = vmatprep.subr.mxu0 0.0
    %1181 = vmatpush1.xpose.msra.mxu0 %v65
    %1182 = vmatprep.subr.mxu0 0.0
    %1183 = vmatpush1.xpose.msra.mxu0 %v62
    %1184 = vmatprep.subr.mxu0 0.0
    %1185 = vmatpush1.xpose.msra.mxu0 %v59
    %1186 = vmatprep.subr.mxu0 0.0
    %1187 = vmatpush2.xpose.msra.mxu0 %v152
    %1188 = vmatprep.subr.mxu0 0.0
    %1189 = vmatpush2.xpose.msra.mxu0 %v149
    %1190 = vmatprep.subr.mxu0 0.0
    %1191 = vmatpush2.xpose.msra.mxu0 %v146
    %1192 = vmatprep.subr.mxu0 0.0
    %1193 = vmatpush2.xpose.msra.mxu0 %v143
    %1194 = vmatprep.subr.mxu0 0.0
    %1195 = vmatpush2.xpose.msra.mxu0 %v140
    %1196 = vmatprep.subr.mxu0 0.0
    %1197 = vmatpush2.xpose.msra.mxu0 %v137
    %1198 = vmatprep.subr.mxu0 0.0
    %1199 = vmatpush2.xpose.msra.mxu0 %v134
    %1200 = vmatprep.subr.mxu0 0.0
    %1201 = vmatpush2.xpose.msra.mxu0 %v131
    %1202 = vmatprep.subr.mxu0 0.0
    %1203 = vmatpush2.xpose.msra.mxu0 %v128
    %1204 = vmatprep.subr.mxu0 0.0
    %1205 = vmatpush2.xpose.msra.mxu0 %v125
    %1206 = vmatprep.subr.mxu0 0.0
    %1207 = vmatpush2.xpose.msra.mxu0 %v122
    %1208 = vmatprep.subr.mxu0 0.0
    %1209 = vmatpush2.xpose.msra.mxu0 %v119
    %1210 = vmatprep.subr.mxu0 0.0
    %1211 = vmatpush2.xpose.msra.mxu0 %v116
    %1212 = vmatprep.subr.mxu0 0.0
    %1213 = vmatpush2.xpose.msra.mxu0 %v113
    %1214 = vmatprep.subr.mxu0 0.0
    %1215 = vmatpush2.xpose.msra.mxu0 %v110
    %1216 = vmatprep.subr.mxu0 0.0
    %1217 = vmatpush2.xpose.msra.mxu0 %v107
    %1218 = vmatprep.mubr.f32.mxu0 0.0
    %1219 = vmatmul.mubr.f32.gmra.mxu0 %v1152
    %v1220 = vpop.f32.mrf.mxu0
    %v1221 = vadd.f32 %v945, %v1220
    %v1222 = vpop.f32.mrf.mxu0
    %v1223 = vadd.f32 %v947, %v1222
    %1224 = vdwg.mxu0
    %v1225 = vmax.f32 %v1221, 0.0
    %v1226 = vmax.f32 %v1223, 0.0
    %v1227 = vadd.f32 %v1225, %v1147
    %v1228 = vadd.f32 %v1226, %v1149
    %v1231 = vcombine.low %v1227, %v1228
    %v1233 = vunpack.c.l.s4 1966171168
    %v1234 = vunpack.c.0.s8 %v1233
    %v1235 = vlaneseq
    %v1236 = vshrl.u32 %v1235, 7
    %v1237 = vsub.s32 %v1234, %v1236
    %v1238 = vrot.slane %v1231, %v1237
    %v1240 = vunpack.c.l.s4 1966171168
    %v1241 = vunpack.c.0.s8 %v1240
    %v1242 = vlaneseq
    %v1243 = vshrl.u32 %v1242, 7
    %v1244 = vsub.s32 %v1241, %v1243
    %v1245 = vrot.slane %v1238, %v1244
    %v1247 = vlaneseq
    %vm1248 = vcmp.ge.s32.totalorder %v1247, 0
    %vm1249 = vcmp.lt.s32.totalorder %v1247, 256
    %vm1250 = vmand %vm1248, %vm1249
    %1251 = vst.msk [vmem:[#allocation2] sm:$0x3] %vm1250, %v1245
    // Predicated region
    $region22: #{tpu_custom_call.1} parent=1 // pred_check
      _
    $region23: #{tpu_custom_call.1} parent=1 // pred_check_branch
      %1253 = sbr.rel (0) target = $region25
    $region24: #{tpu_custom_call.1} parent=1 // pred_region
      %s1255 = ssub.s32 32, 32
      %1256 = vsyncadd [#allocation3], %s1255
      %s1258 = sshll.u32 [#allocation2], 4
      %s1259 = int_to_ptr.vmem [resolvable:$true] %s1258
      %1261 = dma.vmem_to_hbm [thread:$0]  %s1259, 32, %s5, [#allocation3]
    $region25: #{tpu_custom_call.1} parent=1 // pred_fallthru
      _
    // Predicated region
    $region26: #{tpu_custom_call.1} parent=1 // pred_check
      _
    $region27: #{tpu_custom_call.1} parent=1 // pred_check_branch
      %1263 = sbr.rel (0) target = $region29
    $region28: #{tpu_custom_call.1} parent=1 // pred_region
      %1264 = dma.done [#allocation3], 32
    $region29: #{tpu_custom_call.1} parent=1 // pred_fallthru
      _
    %1265 = vsyncpa [#allocation3], 1

</llo_original>
